<compile_context>
chip_gen: v7x
topology: tpu7x:2x2x1
jax: 0.10.0
libtpu: 0.0.40
codegen_flags: <defaults>
</compile_context>

<pallas_src>
import math

import jax
import jax.numpy as jnp
from jax.experimental import pallas as pl
from jax.experimental.pallas import tpu as pltpu


def _round_up(x, m):
    return ((x + m - 1) // m) * m


def _tpu_vmem_capacity_bytes():
    """Best-effort query of per-core VMEM (128 MiB on v5e/v6e, 64 MiB on v7x)."""
    try:
        info = pltpu.get_tpu_info()
        cap = getattr(info, "vmem_capacity_bytes", None)
        if cap:
            return int(cap)
    except Exception:
        pass
    return 128 * 1024 * 1024


# --------------------------------------------------------------------------------------
# Kernels
# --------------------------------------------------------------------------------------
def _make_elementwise_kernel(act, has_k_axis):
    """z = x @ W + b, then relu / sigmoid / identity.  Grid: (batch, feat[, k])."""

    def _finalize(z, b, o_ref):
        z = z + b                          # bias (1, tm) broadcasts over the batch rows
        if act == "relu":
            z = jnp.maximum(z, 0.0)
        elif act == "sigmoid":
            z = jax.nn.sigmoid(z)
        # act is None ('global'): identity
        o_ref[...] = z.astype(o_ref.dtype)

    if not has_k_axis:
        def kernel(x_ref, w_ref, b_ref, o_ref):
            z = jnp.dot(x_ref[...], w_ref[...], preferred_element_type=jnp.float32)
            _finalize(z, b_ref[...], o_ref)
        return kernel

    def kernel(x_ref, w_ref, b_ref, o_ref, acc_ref):
        k = pl.program_id(2)

        @pl.when(k == 0)
        def _():
            acc_ref[...] = jnp.zeros_like(acc_ref)

        acc_ref[...] += jnp.dot(x_ref[...], w_ref[...],
                                preferred_element_type=jnp.float32)

        @pl.when(k == pl.num_programs(2) - 1)
        def _():
            _finalize(acc_ref[...], b_ref[...], o_ref)

    return kernel


def _make_bn_relu_kernel(has_k_axis, eps=1e-5):
    """relu(batchnorm1d(x @ W)).  Grid: (feat[, k]); full batch per feature tile.

    Linear bias is dropped: BN's mean subtraction cancels a per-feature bias (and it
    initialises to 0 anyway).  BatchNorm1d training semantics: per-feature batch mean,
    biased variance, eps=1e-5.  Variance in one pass: E[z^2] - E[z]^2 (clamped at 0).
    """

    def _finalize(z, gamma, beta, o_ref):
        mean = jnp.mean(z, axis=0, keepdims=True)
        mean_sq = jnp.mean(z * z, axis=0, keepdims=True)
        var = jnp.maximum(mean_sq - mean * mean, 0.0)
        scale = gamma * jax.lax.rsqrt(var + eps)
        shift = beta - mean * scale
        o_ref[...] = jnp.maximum(z * scale + shift, 0.0).astype(o_ref.dtype)

    if not has_k_axis:
        def kernel(x_ref, w_ref, gamma_ref, beta_ref, o_ref):
            z = jnp.dot(x_ref[...], w_ref[...], preferred_element_type=jnp.float32)
            _finalize(z, gamma_ref[...], beta_ref[...], o_ref)
        return kernel

    def kernel(x_ref, w_ref, gamma_ref, beta_ref, o_ref, acc_ref):
        k = pl.program_id(1)

        @pl.when(k == 0)
        def _():
            acc_ref[...] = jnp.zeros_like(acc_ref)

        acc_ref[...] += jnp.dot(x_ref[...], w_ref[...],
                                preferred_element_type=jnp.float32)

        @pl.when(k == pl.num_programs(1) - 1)
        def _():
            _finalize(acc_ref[...], gamma_ref[...], beta_ref[...], o_ref)

    return kernel


def _make_softmax_kernel(has_k_axis):
    """softmax(x @ W + b) over features.  Grid: (batch[, k]); full feature width per tile.

    Padded feature columns carry a -1e30 bias so they contribute ~0 to the denominator.
    Denominator via approx reciprocal (EUP slot, ~free next to the exp).
    """

    def _finalize(z, b, o_ref):
        z = z + b
        z_max = jnp.max(z, axis=-1, keepdims=True)
        e = jnp.exp(z - z_max)
        denom = jnp.sum(e, axis=-1, keepdims=True)
        o_ref[...] = (e * pl.reciprocal(denom, approx=True)).astype(o_ref.dtype)

    if not has_k_axis:
        def kernel(x_ref, w_ref, b_ref, o_ref):
            z = jnp.dot(x_ref[...], w_ref[...], preferred_element_type=jnp.float32)
            _finalize(z, b_ref[...], o_ref)
        return kernel

    def kernel(x_ref, w_ref, b_ref, o_ref, acc_ref):
        k = pl.program_id(1)

        @pl.when(k == 0)
        def _():
            acc_ref[...] = jnp.zeros_like(acc_ref)

        acc_ref[...] += jnp.dot(x_ref[...], w_ref[...],
                                preferred_element_type=jnp.float32)

        @pl.when(k == pl.num_programs(1) - 1)
        def _():
            _finalize(acc_ref[...], b_ref[...], o_ref)

    return kernel


# --------------------------------------------------------------------------------------
# Module wrapper
# --------------------------------------------------------------------------------------
class FullyConnectedPallas:
    """JAX/Pallas re-implementation of the PyTorch FullyConnected module."""

    def __init__(self, in_channels, out_channels, activation, normalisation,
                 att=None, key=None, out_dtype=jnp.float32, max_k_tile=512):
        self.att = att
        self.activation = activation
        self.norm = normalisation
        if activation in ("sigmoid", "softmax", "global"):
            self.norm = None                      # mirrors the PyTorch __init__
        self.use_bn = (self.norm == "bn")
        self.act = None if activation == "global" else activation
        self.in_channels = in_channels
        self.out_channels = out_channels
        # bf16 here halves the output HBM writeback if downstream tolerates it;
        # default float32 keeps the PyTorch semantics.
        self.out_dtype = out_dtype

        if key is None:
            key = jax.random.PRNGKey(0)

        # ---- hardware-derived tiling / VMEM plan ----------------------------------
        vmem_cap = _tpu_vmem_capacity_bytes()
        big_vmem = vmem_cap >= 100 * 1024 * 1024          # v5e/v6e yes, v7x no
        self.vmem_limit = min(int(vmem_cap * 3 // 4), 110 * 1024 * 1024)
        self.row_tile = 512 if big_vmem else 256          # pipelined batch-tile target
        feat_cap = 512 if big_vmem else 256               # pipelined feature-tile target

        M, K = out_channels, in_channels
        m128 = _round_up(M, 128)
        tm = min(feat_cap, m128)
        if m128 // tm < 2 and m128 >= 256:
            # Prefer >= 2 feature tiles so both v7x TensorCores get work.
            tm = max(128, (m128 // 2) // 128 * 128)
        self.tm = tm
        self.m_pad = _round_up(M, tm)

        # K (contraction) plan: pad to a lane-dense multiple of 128; split into a
        # reduction grid axis when K exceeds the per-step tile budget.
        k128 = _round_up(max(K, 1), 128)
        tk_cap = max(128, (int(max_k_tile) // 128) * 128)
        self.tk = min(tk_cap, k128)
        self.k_pad = _round_up(K, self.tk)
        self.nk = self.k_pad // self.tk
        self.has_k_axis = self.nk > 1

        # ---- parameters (mirrors init_layer / init_att_layer / init_bn) ------------
        if att:
            w = jnp.ones((M, K), jnp.float32)
        else:
            std = math.sqrt(2.0 / K)
            scale = std * math.sqrt(3.0)
            w = jax.random.uniform(key, (M, K), jnp.float32, -scale, scale)
        b = jnp.zeros((M,), jnp.float32)                 # Linear bias inits to 0
        self.bias = b                                     # unpadded, for references

        pad_m = self.m_pad - M
        pad_k = self.k_pad - K
        w_t = jnp.pad(jnp.transpose(w), ((0, pad_k), (0, pad_m)))     # (Kp, Mp)
        self.w_t = w_t.astype(jnp.bfloat16)               # bf16 weight stream to the MXU

        bias_pad_val = -1e30 if self.act == "softmax" else 0.0
        self.b = jnp.pad(b, (0, pad_m),
                         constant_values=bias_pad_val).reshape(1, self.m_pad)

        if self.use_bn:
            self.gamma = jnp.ones((1, self.m_pad), jnp.float32)   # init_bn: weight = 1
            self.beta = jnp.zeros((1, self.m_pad), jnp.float32)   # init_bn: bias = 0

        if self.act == "softmax":
            self._kernel = _make_softmax_kernel(self.has_k_axis)
        elif self.use_bn:
            self._kernel = _make_bn_relu_kernel(self.has_k_axis)
        else:
            self._kernel = _make_elementwise_kernel(self.act, self.has_k_axis)

    def __call__(self, x):
        # x: [batch, in_channels] float32
        N, K = x.shape
        assert K == self.in_channels
        M, Mp, tm = self.out_channels, self.m_pad, self.tm
        Kp, tk, nk = self.k_pad, self.tk, self.nk

        x_bf = x.astype(jnp.bfloat16)                     # halve x DMA; MXU takes bf16
        if Kp != K:
            x_bf = jnp.pad(x_bf, ((0, 0), (0, Kp - K)))   # zero-pad contraction dim

        resident = pl.Buffered(1)     # single-buffer blocks whose index never changes
        scratch = []
        n_pad = N

        if self.act == "softmax":
            # Batch-tiled: softmax reduces over features -> full padded feature width
            # per tile; rows are independent.
            tn = min(self.row_tile, _round_up(N, 8))
            n_pad = _round_up(N, tn)
            if n_pad != N:
                x_bf = jnp.pad(x_bf, ((0, n_pad - N), (0, 0)))
            nb = n_pad // tn
            out_shape = jax.ShapeDtypeStruct((n_pad, Mp), self.out_dtype)
            if not self.has_k_axis:
                grid = (nb,)
                in_specs = [
                    pl.BlockSpec((tn, Kp), lambda i: (i, 0)),
                    pl.BlockSpec((Kp, Mp), lambda i: (0, 0), pipeline_mode=resident),
                    pl.BlockSpec((1, Mp), lambda i: (0, 0), pipeline_mode=resident),
                ]
                out_specs = pl.BlockSpec((tn, Mp), lambda i: (i, 0))
                dims = ("parallel",)
            else:
                grid = (nb, nk)
                in_specs = [
                    pl.BlockSpec((tn, tk), lambda i, k: (i, k)),
                    pl.BlockSpec((tk, Mp), lambda i, k: (k, 0)),
                    pl.BlockSpec((1, Mp), lambda i, k: (0, 0), pipeline_mode=resident),
                ]
                out_specs = pl.BlockSpec((tn, Mp), lambda i, k: (i, 0))
                dims = ("parallel", "arbitrary")
                scratch = [pltpu.VMEM((tn, Mp), jnp.float32)]
            operands = (x_bf, self.w_t, self.b)

        elif self.use_bn:
            # Feature-tiled: BatchNorm needs full-batch statistics per feature, so the
            # whole batch stays resident per tile; feature tiles are independent.
            nf = Mp // tm
            out_shape = jax.ShapeDtypeStruct((N, Mp), self.out_dtype)
            if not self.has_k_axis:
                grid = (nf,)
                in_specs = [
                    pl.BlockSpec((N, Kp), lambda j: (0, 0), pipeline_mode=resident),
                    pl.BlockSpec((Kp, tm), lambda j: (0, j)),
                    pl.BlockSpec((1, tm), lambda j: (0, j)),
                    pl.BlockSpec((1, tm), lambda j: (0, j)),
                ]
                out_specs = pl.BlockSpec((N, tm), lambda j: (0, j))
                dims = ("parallel",)
            else:
                grid = (nf, nk)
                in_specs = [
                    pl.BlockSpec((N, tk), lambda j, k: (0, k)),
                    pl.BlockSpec((tk, tm), lambda j, k: (k, j)),
                    pl.BlockSpec((1, tm), lambda j, k: (0, j)),
                    pl.BlockSpec((1, tm), lambda j, k: (0, j)),
                ]
                out_specs = pl.BlockSpec((N, tm), lambda j, k: (0, j))
                dims = ("parallel", "arbitrary")
                scratch = [pltpu.VMEM((N, tm), jnp.float32)]
            operands = (x_bf, self.w_t, self.gamma, self.beta)

        else:
            # relu-without-bn / sigmoid / 'global': fully elementwise epilogue ->
            # 2-D (batch x feature) grid bounds VMEM independent of N.
            tn = min(self.row_tile, _round_up(N, 8))
            n_pad = _round_up(N, tn)
            if n_pad != N:
                x_bf = jnp.pad(x_bf, ((0, n_pad - N), (0, 0)))
            nb, nf = n_pad // tn, Mp // tm
            out_shape = jax.ShapeDtypeStruct((n_pad, Mp), self.out_dtype)
            if not self.has_k_axis:
                grid = (nb, nf)
                in_specs = [
                    pl.BlockSpec((tn, Kp), lambda i, j: (i, 0)),
                    pl.BlockSpec((Kp, tm), lambda i, j: (0, j)),
                    pl.BlockSpec((1, tm), lambda i, j: (0, j)),
                ]
                out_specs = pl.BlockSpec((tn, tm), lambda i, j: (i, j))
                dims = ("parallel", "parallel")
            else:
                grid = (nb, nf, nk)
                in_specs = [
                    pl.BlockSpec((tn, tk), lambda i, j, k: (i, k)),
                    pl.BlockSpec((tk, tm), lambda i, j, k: (k, j)),
                    pl.BlockSpec((1, tm), lambda i, j, k: (0, j)),
                ]
                out_specs = pl.BlockSpec((tn, tm), lambda i, j, k: (i, j))
                dims = ("parallel", "parallel", "arbitrary")
                scratch = [pltpu.VMEM((tn, tm), jnp.float32)]
            operands = (x_bf, self.w_t, self.b)

        out = pl.pallas_call(
            self._kernel,
            out_shape=out_shape,
            grid=grid,
            in_specs=in_specs,
            out_specs=out_specs,
            scratch_shapes=scratch,
            compiler_params=pltpu.CompilerParams(
                dimension_semantics=dims,
                vmem_limit_bytes=self.vmem_limit,
            ),
        )(*operands)

        # Slice off padding only on axes that were actually padded (avoids a needless
        # extra HBM pass over the output when shapes already align).
        if n_pad != N:
            out = out[:N]
        if Mp != M:
            out = out[:, :M]
        return out


# --------------------------------------------------------------------------------------
# Pure-JAX reference (same bf16 quantisation of the matmul operands)
# --------------------------------------------------------------------------------------
def _reference(x, module):
    M, K = module.out_channels, module.in_channels
    w = module.w_t[:K, :M].astype(jnp.float32)
    b = module.bias
    xq = x.astype(jnp.bfloat16).astype(jnp.float32)
    z = jnp.dot(xq, w, precision=jax.lax.Precision.HIGHEST) + b
    if module.use_bn:
        mean = jnp.mean(z, axis=0, keepdims=True)
        var = jnp.mean((z - mean) ** 2, axis=0, keepdims=True)
        z = (z - mean) / jnp.sqrt(var + 1e-5)
    if module.act == "relu":
        z = jnp.maximum(z, 0.0)
    elif module.act == "sigmoid":
        z = jax.nn.sigmoid(z)
    elif module.act == "softmax":
        z = jax.nn.softmax(z, axis=-1)
    return z


if __name__ == "__main__":
    key = jax.random.PRNGKey(0)
    keys = jax.random.split(key, 8)

    # --- small-K configs (single K block, no reduction axis) ------------------------
    batch, in_ch, out_ch = 8, 32, 64
    x = jax.random.normal(keys[0], (batch, in_ch), jnp.float32)

    # 1) Linear -> BatchNorm1d -> ReLU (feature-tiled BN path)
    fc_bn_relu = FullyConnectedPallas(in_ch, out_ch, "relu", "bn", key=keys[1])
    y1 = jax.block_until_ready(fc_bn_relu(x))
    assert y1.shape == (batch, out_ch)
    assert jnp.allclose(y1, _reference(x, fc_bn_relu), atol=5e-3, rtol=2e-2), "bn+relu mismatch"

    # 2) Attention-style: Linear (weights=1, bias=0) -> softmax (batch-tiled path)
    fc_att_sm = FullyConnectedPallas(in_ch, out_ch, "softmax", None, att=True, key=keys[2])
    y2 = jax.block_until_ready(fc_att_sm(x))
    assert y2.shape == (batch, out_ch)
    assert jnp.allclose(y2, _reference(x, fc_att_sm), atol=2e-3, rtol=2e-2), "softmax mismatch"

    # 3) Linear -> sigmoid (2-D batch x feature grid)
    fc_sigmoid = FullyConnectedPallas(in_ch, out_ch, "sigmoid", None, key=keys[3])
    y3 = jax.block_until_ready(fc_sigmoid(x))
    assert y3.shape == (batch, out_ch)
    assert jnp.allclose(y3, _reference(x, fc_sigmoid), atol=2e-3, rtol=2e-2), "sigmoid mismatch"

    # --- larger-K configs exercising the K reduction grid axis (nk > 1) -------------
    batch2, in_ch2, out_ch2 = 16, 320, 40
    x2 = jax.random.normal(keys[4], (batch2, in_ch2), jnp.float32)

    # 4) 'global' (plain Linear) with K split into 128-wide reduction tiles
    fc_global_k = FullyConnectedPallas(in_ch2, out_ch2, "global", None,
                                       key=keys[5], max_k_tile=128)
    assert fc_global_k.has_k_axis
    y4 = jax.block_until_ready(fc_global_k(x2))
    assert y4.shape == (batch2, out_ch2)
    assert jnp.allclose(y4, _reference(x2, fc_global_k), atol=5e-3, rtol=2e-2), "global K-axis mismatch"

    # 5) BN+ReLU with the K reduction axis
    fc_bn_relu_k = FullyConnectedPallas(in_ch2, out_ch2, "relu", "bn",
                                        key=keys[6], max_k_tile=128)
    y5 = jax.block_until_ready(fc_bn_relu_k(x2))
    assert y5.shape == (batch2, out_ch2)
    assert jnp.allclose(y5, _reference(x2, fc_bn_relu_k), atol=1e-2, rtol=2e-2), "bn+relu K-axis mismatch"

    # 6) softmax with the K reduction axis
    fc_softmax_k = FullyConnectedPallas(in_ch2, out_ch2, "softmax", None,
                                        key=keys[7], max_k_tile=128)
    y6 = jax.block_until_ready(fc_softmax_k(x2))
    assert y6.shape == (batch2, out_ch2)
    assert jnp.allclose(y6, _reference(x2, fc_softmax_k), atol=2e-3, rtol=2e-2), "softmax K-axis mismatch"

    print("KERNEL_OK")
</pallas_src>

<mosaic_0001>
module attributes {stable_mosaic.version = 11 : i64} {
  func.func @kernel(%arg0: i32, %arg1: memref<8x128xbf16, #tpu.memory_space<vmem>>, %arg2: memref<128x128xbf16, #tpu.memory_space<vmem>>, %arg3: memref<1x128xf32, #tpu.memory_space<vmem>>, %arg4: memref<1x128xf32, #tpu.memory_space<vmem>>, %arg5: memref<8x128xf32, #tpu.memory_space<vmem>>) attributes {dimension_semantics = [#tpu.dimension_semantics<parallel>], iteration_bounds = array<i64: 1>, scalar_prefetch = 0 : i64, scratch_operands = 0 : i64, tpu.core_type = #tpu.core_type<tc>, window_params = [{pipeline_mode = #tpu.pipeline_mode<synchronous>, transform_indices = @transform_0, window_bounds = array<i64: 8, 128>}, {transform_indices = @transform_1, window_bounds = array<i64: 128, 128>}, {transform_indices = @transform_2, window_bounds = array<i64: 1, 128>}, {transform_indices = @transform_3, window_bounds = array<i64: 1, 128>}, {transform_indices = @transform_4, window_bounds = array<i64: 8, 128>}]} {
    %c0 = arith.constant 0 : index
    %c0_0 = arith.constant 0 : index
    %0 = vector.load %arg1[%c0, %c0_0] : memref<8x128xbf16, #tpu.memory_space<vmem>>, vector<8x128xbf16>
    %c0_1 = arith.constant 0 : index
    %c0_2 = arith.constant 0 : index
    %1 = vector.load %arg2[%c0_1, %c0_2] : memref<128x128xbf16, #tpu.memory_space<vmem>>, vector<128x128xbf16>
    %cst = arith.constant dense<0.000000e+00> : vector<8x128xf32>
    %2 = tpu.matmul %0, %1, %cst {dimension_numbers = #tpu.dot_dimension_numbers<[1], [0], [0], [1], [0, 0, 1, 1], [], []>} : vector<8x128xbf16>, vector<128x128xbf16>, vector<8x128xf32> -> vector<8x128xf32>
    %c0_3 = arith.constant 0 : index
    %c0_4 = arith.constant 0 : index
    %3 = vector.load %arg3[%c0_3, %c0_4] : memref<1x128xf32, #tpu.memory_space<vmem>>, vector<1x128xf32>
    %c0_5 = arith.constant 0 : index
    %c0_6 = arith.constant 0 : index
    %4 = vector.load %arg4[%c0_5, %c0_6] : memref<1x128xf32, #tpu.memory_space<vmem>>, vector<1x128xf32>
    %cst_7 = arith.constant dense<0.000000e+00> : vector<128xf32>
    %5 = vector.multi_reduction <add>, %2, %cst_7 [0] : vector<8x128xf32> to vector<128xf32>
    %6 = vector.shape_cast %5 : vector<128xf32> to vector<1x128xf32>
    %cst_8 = arith.constant 8.000000e+00 : f32
    %7 = vector.broadcast %cst_8 : f32 to vector<1x128xf32>
    %8 = arith.divf %6, %7 : vector<1x128xf32>
    %9 = arith.mulf %2, %2 : vector<8x128xf32>
    %cst_9 = arith.constant dense<0.000000e+00> : vector<128xf32>
    %10 = vector.multi_reduction <add>, %9, %cst_9 [0] : vector<8x128xf32> to vector<128xf32>
    %11 = vector.shape_cast %10 : vector<128xf32> to vector<1x128xf32>
    %cst_10 = arith.constant 8.000000e+00 : f32
    %12 = vector.broadcast %cst_10 : f32 to vector<1x128xf32>
    %13 = arith.divf %11, %12 : vector<1x128xf32>
    %14 = arith.mulf %8, %8 : vector<1x128xf32>
    %15 = arith.subf %13, %14 : vector<1x128xf32>
    %cst_11 = arith.constant 0.000000e+00 : f32
    %16 = vector.broadcast %cst_11 : f32 to vector<1x128xf32>
    %17 = arith.maximumf %15, %16 : vector<1x128xf32>
    %cst_12 = arith.constant 9.99999974E-6 : f32
    %18 = vector.broadcast %cst_12 : f32 to vector<1x128xf32>
    %19 = arith.addf %17, %18 : vector<1x128xf32>
    %20 = math.rsqrt %19 : vector<1x128xf32>
    %21 = arith.mulf %3, %20 : vector<1x128xf32>
    %22 = arith.mulf %8, %21 : vector<1x128xf32>
    %23 = arith.subf %4, %22 : vector<1x128xf32>
    %24 = vector.broadcast %21 : vector<1x128xf32> to vector<8x128xf32>
    %25 = arith.mulf %2, %24 : vector<8x128xf32>
    %26 = vector.broadcast %23 : vector<1x128xf32> to vector<8x128xf32>
    %27 = arith.addf %25, %26 : vector<8x128xf32>
    %cst_13 = arith.constant 0.000000e+00 : f32
    %28 = vector.broadcast %cst_13 : f32 to vector<8x128xf32>
    %29 = arith.maximumf %27, %28 : vector<8x128xf32>
    %c0_14 = arith.constant 0 : index
    %c0_15 = arith.constant 0 : index
    %30 = vector.load %arg5[%c0_14, %c0_15] : memref<8x128xf32, #tpu.memory_space<vmem>>, vector<8x128xf32>
    tpu.vector_store %arg5[%c0_14, %c0_15], %29 {strides = array<i32>} : memref<8x128xf32, #tpu.memory_space<vmem>>, vector<8x128xf32>,
    return
  }
  func.func @transform_0(%arg0: i32) -> (i32, i32) {
    %c0_i32 = arith.constant 0 : i32
    %c0_i32_0 = arith.constant 0 : i32
    %c0_i32_1 = arith.constant 0 : i32
    return %c0_i32, %c0_i32_0 : i32, i32
  }
  func.func @transform_1(%arg0: i32) -> (i32, i32) {
    %c0_i32 = arith.constant 0 : i32
    %c0_i32_0 = arith.constant 0 : i32
    return %c0_i32, %arg0 : i32, i32
  }
  func.func @transform_2(%arg0: i32) -> (i32, i32) {
    %c0_i32 = arith.constant 0 : i32
    %c0_i32_0 = arith.constant 0 : i32
    return %c0_i32, %arg0 : i32, i32
  }
  func.func @transform_3(%arg0: i32) -> (i32, i32) {
    %c0_i32 = arith.constant 0 : i32
    %c0_i32_0 = arith.constant 0 : i32
    return %c0_i32, %arg0 : i32, i32
  }
  func.func @transform_4(%arg0: i32) -> (i32, i32) {
    %c0_i32 = arith.constant 0 : i32
    %c0_i32_0 = arith.constant 0 : i32
    return %c0_i32, %arg0 : i32, i32
  }
}

</mosaic_0001>

<llo_original>
// kernel: tpu_custom_call.1
$region0: #{tpu_custom_call.1}
  #allocation0 [shape = 'u32[]', space=smem, size = 0x4, offset = 0x4, fixed_abs, tag = 'smem constant byte address 0x4 - core index']
  #allocation1 [shape = 'u32[144,128]{1,0:T(1,128)}', space=vmem, size = 0x12000, scoped, tag = 'internal scratch']
  %s0 = inlined_call_operand.hbm [shape: bf16[8,128], index: 0, kind: input, shape index: {}]
  %s1 = inlined_call_operand.hbm [shape: bf16[128,128], index: 1, kind: input, shape index: {}]
  %s2 = inlined_call_operand.hbm [shape: f32[1,128], index: 2, kind: input, shape index: {}]
  %s3 = inlined_call_operand.hbm [shape: f32[1,128], index: 3, kind: input, shape index: {}]
  %s4 = inlined_call_operand.hbm [shape: f32[8,128], index: 4, kind: output, shape index: {}]
  %s5 = sld [smem:[#allocation0]]
  $region42: #{tpu_custom_call.1} parent=0
    _
  %s7 = ssub.s32 1, %s5
  %s8 = scalar_select 0, %s7, %s5
  $region1: #{tpu_custom_call.1} parent=0
    #allocation2 [shape = 'u8[2048]{0}', space=vmem, size = 0x800, scoped, tag = 'input window, operand 0, single buffered']
    #allocation3 [shape = 's32[1]{0}', space=sflag, size = 0x4, scoped, tag = 'scoped memory for tpu_custom_call.1']
    #allocation4 [shape = 's32[1]{0}', space=sflag, size = 0x4, scoped, tag = 'scoped memory for tpu_custom_call.1']
    #allocation5 [shape = 'u8[32768]{0}', space=vmem, size = 0x8000, scoped, tag = 'input window, operand 1, single buffered']
    #allocation6 [shape = 's32[1]{0}', space=sflag, size = 0x4, scoped, tag = 'scoped memory for tpu_custom_call.1']
    #allocation7 [shape = 'u8[512]{0}', space=vmem, size = 0x400, scoped, tag = 'input window, operand 2, single buffered']
    #allocation8 [shape = 'u8[512]{0}', space=vmem, size = 0x400, scoped, tag = 'input window, operand 3, single buffered']
    #allocation9 [shape = 's32[1]{0}', space=sflag, size = 0x4, scoped, tag = 'scoped memory for tpu_custom_call.1']
    #allocation10 [shape = 'u8[4096]{0}', space=vmem, size = 0x1000, scoped, tag = 'output window, operand 0, single buffered']
    %9 = vsyncpa [#allocation3], 0
    %10 = vsyncpa [#allocation6], 0
    %11 = vsyncpa [#allocation9], 0
    %12 = vsyncpa [#allocation4], 0
    // Predicated region
    $region2: #{tpu_custom_call.1} parent=1 // pred_check
      _
    $region3: #{tpu_custom_call.1} parent=1 // pred_check_branch
      %14 = sbr.rel (0) target = $region5
    $region4: #{tpu_custom_call.1} parent=1 // pred_region
      %s16 = ssub.s32 64, 64
      %17 = vsyncadd [#allocation3], %s16
      %s19 = sshll.u32 [#allocation2], 4
      %s20 = int_to_ptr.vmem [resolvable:$true] %s19
      %22 = dma.hbm_to_vmem [thread:$0]  %s0, 64, %s20, [#allocation3]
    $region5: #{tpu_custom_call.1} parent=1 // pred_fallthru
      _
    // Predicated region
    $region6: #{tpu_custom_call.1} parent=1 // pred_check
      _
    $region7: #{tpu_custom_call.1} parent=1 // pred_check_branch
      %24 = sbr.rel (0) target = $region9
    $region8: #{tpu_custom_call.1} parent=1 // pred_region
      %s26 = ssub.s32 1024, 1024
      %27 = vsyncadd [#allocation6], %s26
      %s28 = sshll.u32 [#allocation5], 4
      %s29 = int_to_ptr.vmem [resolvable:$true] %s28
      %34 = dma.hbm_to_vmem [thread:$0]  %s1, 1024, %s29, [#allocation6], 64, 64, 4
    $region9: #{tpu_custom_call.1} parent=1 // pred_fallthru
      _
    // Predicated region
    $region10: #{tpu_custom_call.1} parent=1 // pred_check
      _
    $region11: #{tpu_custom_call.1} parent=1 // pred_check_branch
      %36 = sbr.rel (0) target = $region13
    $region12: #{tpu_custom_call.1} parent=1 // pred_region
      %s38 = ssub.s32 16, 16
      %39 = vsyncadd [#allocation6], %s38
      %s41 = sshll.u32 [#allocation7], 4
      %s42 = int_to_ptr.vmem [resolvable:$true] %s41
      %44 = dma.hbm_to_vmem [thread:$0]  %s2, 16, %s42, [#allocation6]
    $region13: #{tpu_custom_call.1} parent=1 // pred_fallthru
      _
    // Predicated region
    $region14: #{tpu_custom_call.1} parent=1 // pred_check
      _
    $region15: #{tpu_custom_call.1} parent=1 // pred_check_branch
      %46 = sbr.rel (0) target = $region17
    $region16: #{tpu_custom_call.1} parent=1 // pred_region
      %s48 = ssub.s32 16, 16
      %49 = vsyncadd [#allocation9], %s48
      %s51 = sshll.u32 [#allocation8], 4
      %s52 = int_to_ptr.vmem [resolvable:$true] %s51
      %54 = dma.hbm_to_vmem [thread:$0]  %s3, 16, %s52, [#allocation9]
    $region17: #{tpu_custom_call.1} parent=1 // pred_fallthru
      _
    // Predicated region
    $region18: #{tpu_custom_call.1} parent=1 // pred_check
      _
    $region19: #{tpu_custom_call.1} parent=1 // pred_check_branch
      %56 = sbr.rel (0) target = $region21
    $region20: #{tpu_custom_call.1} parent=1 // pred_region
      %57 = dma.done [#allocation3], 64
    $region21: #{tpu_custom_call.1} parent=1 // pred_fallthru
      _
    // Predicated region
    $region22: #{tpu_custom_call.1} parent=1 // pred_check
      _
    $region23: #{tpu_custom_call.1} parent=1 // pred_check_branch
      %59 = sbr.rel (0) target = $region25
    $region24: #{tpu_custom_call.1} parent=1 // pred_region
      %60 = dma.done [#allocation6], 1024
    $region25: #{tpu_custom_call.1} parent=1 // pred_fallthru
      _
    // Predicated region
    $region26: #{tpu_custom_call.1} parent=1 // pred_check
      _
    $region27: #{tpu_custom_call.1} parent=1 // pred_check_branch
      %62 = sbr.rel (0) target = $region29
    $region28: #{tpu_custom_call.1} parent=1 // pred_region
      %63 = dma.done [#allocation6], 16
    $region29: #{tpu_custom_call.1} parent=1 // pred_fallthru
      _
    // Predicated region
    $region30: #{tpu_custom_call.1} parent=1 // pred_check
      _
    $region31: #{tpu_custom_call.1} parent=1 // pred_check_branch
      %65 = sbr.rel (0) target = $region33
    $region32: #{tpu_custom_call.1} parent=1 // pred_region
      %66 = dma.done [#allocation9], 16
    $region33: #{tpu_custom_call.1} parent=1 // pred_fallthru
      _
    %v68 = vld [vmem:[#allocation2] sm:$0xf]
    %v69 = vld [vmem:[#allocation5] sm:$0xf]
    %v70 = vld [vmem:[#allocation5 + $0x4] sm:$0xf]
    %v71 = vld [vmem:[#allocation5 + $0x8] sm:$0xf]
    %v72 = vld [vmem:[#allocation5 + $0xc] sm:$0xf]
    %v73 = vld [vmem:[#allocation5 + $0x10] sm:$0xf]
    %v74 = vld [vmem:[#allocation5 + $0x14] sm:$0xf]
    %v75 = vld [vmem:[#allocation5 + $0x18] sm:$0xf]
    %v76 = vld [vmem:[#allocation5 + $0x1c] sm:$0xf]
    %v77 = vld [vmem:[#allocation5 + $0x20] sm:$0xf]
    %v78 = vld [vmem:[#allocation5 + $0x24] sm:$0xf]
    %v79 = vld [vmem:[#allocation5 + $0x28] sm:$0xf]
    %v80 = vld [vmem:[#allocation5 + $0x2c] sm:$0xf]
    %v81 = vld [vmem:[#allocation5 + $0x30] sm:$0xf]
    %v82 = vld [vmem:[#allocation5 + $0x34] sm:$0xf]
    %v83 = vld [vmem:[#allocation5 + $0x38] sm:$0xf]
    %v84 = vld [vmem:[#allocation5 + $0x3c] sm:$0xf]
    %v101 = vunpack.c.l.b16 %v69
    %v102 = vunpack.c.l.b16 %v70
    %v103 = vunpack.c.l.b16 %v71
    %v104 = vunpack.c.l.b16 %v72
    %v105 = vunpack.c.l.b16 %v73
    %v106 = vunpack.c.l.b16 %v74
    %v107 = vunpack.c.l.b16 %v75
    %v108 = vunpack.c.l.b16 %v76
    %v109 = vunpack.c.l.b16 %v77
    %v110 = vunpack.c.l.b16 %v78
    %v111 = vunpack.c.l.b16 %v79
    %v112 = vunpack.c.l.b16 %v80
    %v113 = vunpack.c.l.b16 %v81
    %v114 = vunpack.c.l.b16 %v82
    %v115 = vunpack.c.l.b16 %v83
    %v116 = vunpack.c.l.b16 %v84
    %v117 = vpack.c.b16 %v102, %v101
    %v118 = vpack.c.b16 %v104, %v103
    %v119 = vpack.c.b16 %v106, %v105
    %v120 = vpack.c.b16 %v108, %v107
    %v121 = vpack.c.b16 %v110, %v109
    %v122 = vpack.c.b16 %v112, %v111
    %v123 = vpack.c.b16 %v114, %v113
    %v124 = vpack.c.b16 %v116, %v115
    %133 = vmatprep.subr.bf16.mxu0 0
    %134 = vmatpush1.bf16.msra.mxu0 %v117
    %135 = vmatprep.subr.bf16.mxu0 0
    %136 = vmatpush1.bf16.msra.mxu0 %v118
    %137 = vmatprep.subr.bf16.mxu0 0
    %138 = vmatpush1.bf16.msra.mxu0 %v119
    %139 = vmatprep.subr.bf16.mxu0 0
    %140 = vmatpush1.bf16.msra.mxu0 %v120
    %141 = vmatprep.subr.bf16.mxu0 0
    %142 = vmatpush1.bf16.msra.mxu0 %v121
    %143 = vmatprep.subr.bf16.mxu0 0
    %144 = vmatpush1.bf16.msra.mxu0 %v122
    %145 = vmatprep.subr.bf16.mxu0 0
    %146 = vmatpush1.bf16.msra.mxu0 %v123
    %147 = vmatprep.subr.bf16.mxu0 0
    %148 = vmatpush1.bf16.msra.mxu0 %v124
    %149 = vmatprep.subr.bf16.mxu0 0
    %150 = vmatpush1.bf16.msra.mxu0 0
    %151 = vmatprep.subr.bf16.mxu0 0
    %152 = vmatpush1.bf16.msra.mxu0 0
    %153 = vmatprep.subr.bf16.mxu0 0
    %154 = vmatpush1.bf16.msra.mxu0 0
    %155 = vmatprep.subr.bf16.mxu0 0
    %156 = vmatpush1.bf16.msra.mxu0 0
    %157 = vmatprep.subr.bf16.mxu0 0
    %158 = vmatpush1.bf16.msra.mxu0 0
    %159 = vmatprep.subr.bf16.mxu0 0
    %160 = vmatpush1.bf16.msra.mxu0 0
    %161 = vmatprep.subr.bf16.mxu0 0
    %162 = vmatpush1.bf16.msra.mxu0 0
    %163 = vmatprep.subr.bf16.mxu0 0
    %164 = vmatpush1.bf16.msra.mxu0 0
    %165 = vmatprep.mubr.bf16.mxu0 0
    %166 = vmatmul.mubr.bf16.gmra.mrb[0].mxu0 %v68
    %v167 = vpop.f32.mrb[0].mxu0
    %v168 = vadd.f32 0.0, %v167
    %v169 = vpop.f32.mrb[0].mxu0
    %v170 = vpop.f32.mrb[0].mxu0
    %v171 = vpop.f32.mrb[0].mxu0
    %172 = vdwg.mxu0
    %v173 = vld [vmem:[#allocation7] sm:$0x1]
    %v174 = vld [vmem:[#allocation8] sm:$0x1]
    %v175 = vrot.slane %v168, 4
    %v176 = vadd.f32 %v168, %v175
    %v177 = vrot.slane %v176, 2
    %v178 = vadd.f32 %v176, %v177
    %v179 = vrot.slane %v178, 1
    %v180 = vadd.f32 %v178, %v179
    %v181 = vrcp.pop 8.0
    %v182 = vmul.f32 %v180, %v181
    %v183 = vmul.f32 %v168, %v168
    %v184 = vrot.slane %v183, 4
    %v185 = vadd.f32 %v183, %v184
    %v186 = vrot.slane %v185, 2
    %v187 = vadd.f32 %v185, %v186
    %v188 = vrot.slane %v187, 1
    %v189 = vadd.f32 %v187, %v188
    %v190 = vmul.f32 %v189, %v181
    %v191 = vmul.f32 %v182, %v182
    %v192 = vsub.f32 %v190, %v191
    %v193 = vmax.f32 %v192, 0.0
    %v194 = vadd.f32 %v193, 1e-05
    %v195 = vrsqrt.pop %v194
    %v196 = vmul.f32 %v173, %v195
    %v197 = vmul.f32 %v182, %v196
    %v198 = vsub.f32 %v174, %v197
    %v200 = vlaneseq
    %v201 = vshrl.u32 %v200, 7
    %v202 = vsub.s32 0, %v201
    %v203 = vrot.slane %v196, %v202
    %v205 = vmul.f32 %v168, %v203
    %v207 = vlaneseq
    %v208 = vshrl.u32 %v207, 7
    %v209 = vsub.s32 0, %v208
    %v210 = vrot.slane %v198, %v209
    %v212 = vadd.f32 %v205, %v210
    %v213 = vmax.f32 %v212, 0.0
    %214 = vst [vmem:[#allocation10] sm:$0xff] %v213
    // Predicated region
    $region34: #{tpu_custom_call.1} parent=1 // pred_check
      _
    $region35: #{tpu_custom_call.1} parent=1 // pred_check_branch
      %216 = sbr.rel (0) target = $region37
    $region36: #{tpu_custom_call.1} parent=1 // pred_region
      %s218 = ssub.s32 128, 128
      %219 = vsyncadd [#allocation4], %s218
      %s221 = sshll.u32 [#allocation10], 4
      %s222 = int_to_ptr.vmem [resolvable:$true] %s221
      %224 = dma.vmem_to_hbm [thread:$0]  %s222, 128, %s4, [#allocation4]
    $region37: #{tpu_custom_call.1} parent=1 // pred_fallthru
      _
    // Predicated region
    $region38: #{tpu_custom_call.1} parent=1 // pred_check
      _
    $region39: #{tpu_custom_call.1} parent=1 // pred_check_branch
      %226 = sbr.rel (0) target = $region41
    $region40: #{tpu_custom_call.1} parent=1 // pred_region
      %227 = dma.done [#allocation4], 128
    $region41: #{tpu_custom_call.1} parent=1 // pred_fallthru
      _
    %228 = vsyncpa [#allocation3], 1
    %229 = vsyncpa [#allocation6], 1
    %230 = vsyncpa [#allocation9], 1
    %231 = vsyncpa [#allocation4], 1

</llo_original>
